<compile_context>
chip_gen: v6e
topology: v6e:2x2x1
jax: 0.10.0
libtpu: 0.0.40
codegen_flags: <defaults>
</compile_context>

<pallas_src>
import jax
import jax.numpy as jnp
from jax.experimental import pallas as pl
from jax.experimental.pallas import tpu as pltpu


def _fused_linear_kernel(x_ref, w_ref, b_ref, o_ref):
    # One MXU matmul per batch tile: [TM, K*D] @ [K*D, out_wp] with f32
    # accumulation, then a lane-dense f32 bias add.  Everything the original
    # module computes after the embedding lookup collapses into this.
    o_ref[...] = (
        jnp.dot(x_ref[...], w_ref[...], preferred_element_type=jnp.float32)
        + b_ref[...]
    ).astype(o_ref.dtype)


def _round_up(v, m):
    return ((v + m - 1) // m) * m


def _pick_tm(B, block_m):
    """Batch-tile rows: large to amortize per-step pipeline overhead, but keep
    >= 2 grid steps when B is big enough so both v7x TensorCores get work."""
    if B > block_m:
        return block_m
    if B >= 16:
        return _round_up((B + 1) // 2, 8)     # multiple of 8, >= 2 grid steps
    return B                                  # tiny batch: block == full dim (allowed)


def speech_encoder_forward(x, params, do_clf=False, *, block_m=1024):
    """Pallas implementation of SpeechEncoder.forward.

    x      : [B, K, D] -- stacked pooled wav2vec embeddings (torch.stack(..., dim=1)).
             Compute dtype is x.dtype (f32, or bf16 iff stored bf16 upstream);
             accumulation is always f32.
    params : (w_proj [D, P], b_proj [P], w_clf [K*P, L], b_clf [L]); weights are
             pre-transposed to [in, out] so y = x @ W + b  (== torch x @ W.T + b).
    """
    B, K, D = x.shape
    w_proj, b_proj, w_clf, b_clf = params
    P = w_proj.shape[1]
    L = w_clf.shape[1]
    KP = K * P

    compute_dtype = x.dtype
    x2 = x.reshape(B, K * D)                 # free contiguous reshape; no pad, no cast

    # Block-diagonal projection weight [K*D, K*P]: the lane concatenation of the
    # K per-context projections is exactly nn.Flatten's output layout.
    w_bd = jnp.kron(jnp.eye(K, dtype=jnp.float32), w_proj.astype(jnp.float32))
    b_flat = jnp.tile(b_proj, K).reshape(1, KP).astype(jnp.float32)

    if do_clf:
        # Fold classifier into the same matmul (pure linear composition):
        #   (x @ W_bd + b) @ W_c + b_c  ==  x @ (W_bd @ W_c) + (b @ W_c + b_c)
        out_dim = L
        out_wp = _round_up(max(L, 128), 128)                       # lane-dense width
        wc = jnp.pad(w_clf.astype(jnp.float32), ((0, 0), (0, out_wp - L)))
        bc = jnp.pad(b_clf.astype(jnp.float32), (0, out_wp - L)).reshape(1, out_wp)
        hi = jax.lax.Precision.HIGHEST                             # tiny, fold accurately
        w = jnp.dot(w_bd, wc, precision=hi)                        # [K*D, out_wp]
        b = jnp.dot(b_flat, wc, precision=hi) + bc                 # [1, out_wp]
    else:
        out_dim = KP
        out_wp = _round_up(max(KP, 128), 128)
        w = jnp.pad(w_bd, ((0, 0), (0, out_wp - KP)))
        b = jnp.pad(b_flat, ((0, 0), (0, out_wp - KP)))

    w = w.astype(compute_dtype)              # matmul operands in x's native dtype
    b = b.astype(jnp.float32)                # bias add stays f32 (v5e VPU has no bf16)

    TM = _pick_tm(B, block_m)
    grid = (pl.cdiv(B, TM),)                 # ragged last block: OOB rows masked on
                                             # writeback; no cross-row reduction exists.

    itemsize = x2.dtype.itemsize
    cost = pl.CostEstimate(
        flops=int(2 * B * (K * D) * out_wp),
        transcendentals=0,
        bytes_accessed=int(x2.size * itemsize + w.size * w.dtype.itemsize
                           + b.size * 4 + B * out_wp * 4),
    )

    out = pl.pallas_call(
        _fused_linear_kernel,
        out_shape=jax.ShapeDtypeStruct((B, out_wp), jnp.float32),
        grid=grid,
        in_specs=[
            pl.BlockSpec((TM, K * D), lambda i: (i, 0)),       # streamed batch tile
            pl.BlockSpec((K * D, out_wp), lambda i: (0, 0)),   # resident fused weight
            pl.BlockSpec((1, out_wp), lambda i: (0, 0)),       # resident fused bias
        ],
        out_specs=pl.BlockSpec((TM, out_wp), lambda i: (i, 0)),
        compiler_params=pltpu.CompilerParams(
            dimension_semantics=("parallel",),
            vmem_limit_bytes=48 * 1024 * 1024,
        ),
        cost_estimate=cost,
    )(x2, w, b)

    return out if out_wp == out_dim else out[:, :out_dim]


def _reference_forward(x, params, do_clf=False):
    w_proj, b_proj, w_clf, b_clf = params
    hi = jax.lax.Precision.HIGHEST
    y = jnp.matmul(x, w_proj, precision=hi) + b_proj          # [B, K, P]
    out = y.reshape(x.shape[0], -1)                            # flatten -> [B, K*P]
    if do_clf:
        out = jnp.matmul(out, w_clf, precision=hi) + b_clf     # [B, L]
    return out


if __name__ == "__main__":
    # Shapes consistent with the module:
    #   use='extract_feature' -> input_dim D = 512
    #   args.K = 4, args.output_dim = 32, args.num_label = 7, batch B = 2
    B, K, D = 2, 4, 512
    P, L = 32, 7

    key = jax.random.PRNGKey(0)
    k_x, k_wp, k_bp, k_wc, k_bc, k_x2 = jax.random.split(key, 6)

    # Synthetic stacked pooled embeddings (what contextualize + torch.stack produce).
    x = jax.random.normal(k_x, (B, K, D), dtype=jnp.float32)

    # Deterministic parameters (stored pre-transposed: [in, out]).
    w_proj = jax.random.normal(k_wp, (D, P), dtype=jnp.float32) * 0.02
    b_proj = jax.random.normal(k_bp, (P,), dtype=jnp.float32) * 0.02
    w_clf = jax.random.normal(k_wc, (K * P, L), dtype=jnp.float32) * 0.02
    b_clf = jax.random.normal(k_bc, (L,), dtype=jnp.float32) * 0.02
    params = (w_proj, b_proj, w_clf, b_clf)

    # f32 path -- projection+flatten and fully-folded classifier.
    out_flat = speech_encoder_forward(x, params, do_clf=False)
    out_clf = speech_encoder_forward(x, params, do_clf=True)
    jax.block_until_ready((out_flat, out_clf))
    assert out_flat.shape == (B, K * P), out_flat.shape
    assert out_clf.shape == (B, L), out_clf.shape

    ref_flat = _reference_forward(x, params, do_clf=False)
    ref_clf = _reference_forward(x, params, do_clf=True)
    assert jnp.allclose(out_flat, ref_flat, atol=1e-4, rtol=1e-4)
    # Classifier folding re-associates the two matmuls -> slightly looser f32 tol.
    assert jnp.allclose(out_clf, ref_clf, atol=1e-3, rtol=1e-3)

    # Ragged / multi-tile batch: exercises pl.cdiv grid, 2-tile split, no wrapper pad.
    B2 = 20
    xr = jax.random.normal(k_x2, (B2, K, D), dtype=jnp.float32)
    out_r = speech_encoder_forward(xr, params, do_clf=True)
    jax.block_until_ready(out_r)
    assert out_r.shape == (B2, L)
    assert jnp.allclose(out_r, _reference_forward(xr, params, do_clf=True),
                        atol=1e-3, rtol=1e-3)

    # bf16-input path: taken only when x is *stored* bf16 upstream (simulated here);
    # no wrapper-side cast of an f32 x, f32 MXU accumulation.  Looser tolerance.
    x_bf16 = x.astype(jnp.bfloat16)
    out_bf16 = speech_encoder_forward(x_bf16, params, do_clf=False)
    jax.block_until_ready(out_bf16)
    assert jnp.allclose(out_bf16, ref_flat, atol=5e-2, rtol=5e-2)

    # TODO(synk): wav2vec2 feature extraction / JSON embedding caching in __init__
    # is file I/O + a pretrained HF model, not kernel compute; it is replaced here
    # by synthetic pooled embeddings.
    print("KERNEL_OK")
</pallas_src>

<mosaic_0001>
module attributes {stable_mosaic.version = 11 : i64} {
  func.func @_fused_linear_kernel(%arg0: i32, %arg1: memref<2x2048xf32, #tpu.memory_space<vmem>>, %arg2: memref<2048x128xf32, #tpu.memory_space<vmem>>, %arg3: memref<1x128xf32, #tpu.memory_space<vmem>>, %arg4: memref<2x128xf32, #tpu.memory_space<vmem>>) attributes {dimension_semantics = [#tpu.dimension_semantics<parallel>], iteration_bounds = array<i64: 1>, scalar_prefetch = 0 : i64, scratch_operands = 0 : i64, tpu.core_type = #tpu.core_type<tc>, window_params = [{transform_indices = @transform_0, window_bounds = array<i64: 2, 2048>}, {pipeline_mode = #tpu.pipeline_mode<synchronous>, transform_indices = @transform_1, window_bounds = array<i64: 2048, 128>}, {pipeline_mode = #tpu.pipeline_mode<synchronous>, transform_indices = @transform_2, window_bounds = array<i64: 1, 128>}, {transform_indices = @transform_3, window_bounds = array<i64: 2, 128>}]} {
    %c0 = arith.constant 0 : index
    %c0_0 = arith.constant 0 : index
    %0 = vector.load %arg1[%c0, %c0_0] : memref<2x2048xf32, #tpu.memory_space<vmem>>, vector<2x2048xf32>
    %c0_1 = arith.constant 0 : index
    %c0_2 = arith.constant 0 : index
    %1 = vector.load %arg2[%c0_1, %c0_2] : memref<2048x128xf32, #tpu.memory_space<vmem>>, vector<2048x128xf32>
    %cst = arith.constant dense<0.000000e+00> : vector<2x128xf32>
    %2 = tpu.matmul %0, %1, %cst {dimension_numbers = #tpu.dot_dimension_numbers<[1], [0], [0], [1], [0, 0, 1, 1], [], []>} : vector<2x2048xf32>, vector<2048x128xf32>, vector<2x128xf32> -> vector<2x128xf32>
    %c0_3 = arith.constant 0 : index
    %c0_4 = arith.constant 0 : index
    %3 = vector.load %arg3[%c0_3, %c0_4] : memref<1x128xf32, #tpu.memory_space<vmem>>, vector<1x128xf32>
    %4 = vector.broadcast %3 : vector<1x128xf32> to vector<2x128xf32>
    %5 = arith.addf %2, %4 : vector<2x128xf32>
    %c0_5 = arith.constant 0 : index
    %c0_6 = arith.constant 0 : index
    %6 = vector.load %arg4[%c0_5, %c0_6] : memref<2x128xf32, #tpu.memory_space<vmem>>, vector<2x128xf32>
    tpu.vector_store %arg4[%c0_5, %c0_6], %5 {strides = array<i32>} : memref<2x128xf32, #tpu.memory_space<vmem>>, vector<2x128xf32>,
    return
  }
  func.func @transform_0(%arg0: i32) -> (i32, i32) {
    %c0_i32 = arith.constant 0 : i32
    %c0_i32_0 = arith.constant 0 : i32
    return %arg0, %c0_i32 : i32, i32
  }
  func.func @transform_1(%arg0: i32) -> (i32, i32) {
    %c0_i32 = arith.constant 0 : i32
    %c0_i32_0 = arith.constant 0 : i32
    %c0_i32_1 = arith.constant 0 : i32
    return %c0_i32, %c0_i32_0 : i32, i32
  }
  func.func @transform_2(%arg0: i32) -> (i32, i32) {
    %c0_i32 = arith.constant 0 : i32
    %c0_i32_0 = arith.constant 0 : i32
    %c0_i32_1 = arith.constant 0 : i32
    return %c0_i32, %c0_i32_0 : i32, i32
  }
  func.func @transform_3(%arg0: i32) -> (i32, i32) {
    %c0_i32 = arith.constant 0 : i32
    %c0_i32_0 = arith.constant 0 : i32
    return %arg0, %c0_i32 : i32, i32
  }
}

</mosaic_0001>

<llo_original>
// kernel: tpu_custom_call.1
$region0: #{tpu_custom_call.1}
  #allocation0 [shape = 'u32[]', space=smem, size = 0x4, offset = 0x4, fixed_abs, tag = 'smem constant byte address 0x4 - core index']
  #allocation1 [shape = 'u32[144,128]{1,0:T(1,128)}', space=vmem, size = 0x12000, scoped, tag = 'internal scratch']
  %s0 = inlined_call_operand.hbm [shape: f32[2,2048], index: 0, kind: input, shape index: {}]
  %s1 = inlined_call_operand.hbm [shape: f32[2048,128], index: 1, kind: input, shape index: {}]
  %s2 = inlined_call_operand.vmem [shape: f32[1,128], index: 2, kind: input, shape index: {}]
  %s3 = inlined_call_operand.hbm [shape: f32[2,128], index: 3, kind: output, shape index: {}]
  %s4 = sld [smem:[#allocation0]]
  $region30: #{tpu_custom_call.1} parent=0
    _
  %s6 = ssub.s32 1, %s4
  %s7 = scalar_select 0, %s6, %s4
  $region1: #{tpu_custom_call.1} parent=0
    #allocation2 [shape = 'u8[16384]{0}', space=vmem, size = 0x4000, scoped, tag = 'input window, operand 0, single buffered']
    #allocation3 [shape = 's32[1]{0}', space=sflag, size = 0x4, scoped, tag = 'scoped memory for tpu_custom_call.1']
    #allocation4 [shape = 's32[1]{0}', space=sflag, size = 0x4, scoped, tag = 'scoped memory for tpu_custom_call.1']
    #allocation5 [shape = 'u8[1048576]{0}', space=vmem, size = 0x100000, scoped, tag = 'input window, operand 1, single buffered']
    #allocation6 [shape = 's32[1]{0}', space=sflag, size = 0x4, scoped, tag = 'scoped memory for tpu_custom_call.1']
    #allocation7 [shape = 'u8[1024]{0}', space=vmem, size = 0x400, scoped, tag = 'output window, operand 0, single buffered']
    %8 = vsyncpa [#allocation3], 0
    %9 = vsyncpa [#allocation6], 0
    %10 = vsyncpa [#allocation4], 0
    // Predicated region
    $region2: #{tpu_custom_call.1} parent=1 // pred_check
      _
    $region3: #{tpu_custom_call.1} parent=1 // pred_check_branch
      %12 = sbr.rel (0) target = $region5
    $region4: #{tpu_custom_call.1} parent=1 // pred_region
      %s14 = ssub.s32 512, 512
      %15 = vsyncadd [#allocation3], %s14
      %s17 = sshll.u32 [#allocation2], 4
      %s18 = int_to_ptr.vmem [resolvable:$true] %s17
      %20 = dma.hbm_to_vmem [thread:$0]  %s0, 512, %s18, [#allocation3]
    $region5: #{tpu_custom_call.1} parent=1 // pred_fallthru
      _
    // Predicated region
    $region6: #{tpu_custom_call.1} parent=1 // pred_check
      _
    $region7: #{tpu_custom_call.1} parent=1 // pred_check_branch
      %22 = sbr.rel (0) target = $region9
    $region8: #{tpu_custom_call.1} parent=1 // pred_region
      %s24 = ssub.s32 32768, 32768
      %25 = vsyncadd [#allocation6], %s24
      %s26 = sshll.u32 [#allocation5], 4
      %s27 = int_to_ptr.vmem [resolvable:$true] %s26
      %32 = dma.hbm_to_vmem [thread:$0]  %s1, 32768, %s27, [#allocation6], 128, 128, 8
    $region9: #{tpu_custom_call.1} parent=1 // pred_fallthru
      _
    // Predicated region
    $region10: #{tpu_custom_call.1} parent=1 // pred_check
      _
    $region11: #{tpu_custom_call.1} parent=1 // pred_check_branch
      %34 = sbr.rel (0) target = $region13
    $region12: #{tpu_custom_call.1} parent=1 // pred_region
      _
    $region13: #{tpu_custom_call.1} parent=1 // pred_fallthru
      _
    // Predicated region
    $region14: #{tpu_custom_call.1} parent=1 // pred_check
      _
    $region15: #{tpu_custom_call.1} parent=1 // pred_check_branch
      %36 = sbr.rel (0) target = $region17
    $region16: #{tpu_custom_call.1} parent=1 // pred_region
      %37 = dma.done [#allocation3], 512
    $region17: #{tpu_custom_call.1} parent=1 // pred_fallthru
      _
    // Predicated region
    $region18: #{tpu_custom_call.1} parent=1 // pred_check
      _
    $region19: #{tpu_custom_call.1} parent=1 // pred_check_branch
      %39 = sbr.rel (0) target = $region21
    $region20: #{tpu_custom_call.1} parent=1 // pred_region
      %40 = dma.done [#allocation6], 32768
    $region21: #{tpu_custom_call.1} parent=1 // pred_fallthru
      _
    %v41 = vld [vmem:[#allocation2] sm:$0xff]
    %v42 = vld [vmem:[#allocation2 + $0x8] sm:$0xff]
    %v43 = vld [vmem:[#allocation2 + $0x10] sm:$0xff]
    %v44 = vld [vmem:[#allocation2 + $0x18] sm:$0xff]
    %v45 = vld [vmem:[#allocation5] sm:$0xff]
    %v46 = vld [vmem:[#allocation5 + $0x8] sm:$0xff]
    %v47 = vld [vmem:[#allocation5 + $0x10] sm:$0xff]
    %v48 = vld [vmem:[#allocation5 + $0x18] sm:$0xff]
    %v49 = vld [vmem:[#allocation5 + $0x20] sm:$0xff]
    %v50 = vld [vmem:[#allocation5 + $0x28] sm:$0xff]
    %v51 = vld [vmem:[#allocation5 + $0x30] sm:$0xff]
    %v52 = vld [vmem:[#allocation5 + $0x38] sm:$0xff]
    %v53 = vld [vmem:[#allocation5 + $0x40] sm:$0xff]
    %v54 = vld [vmem:[#allocation5 + $0x48] sm:$0xff]
    %v55 = vld [vmem:[#allocation5 + $0x50] sm:$0xff]
    %v56 = vld [vmem:[#allocation5 + $0x58] sm:$0xff]
    %v57 = vld [vmem:[#allocation5 + $0x60] sm:$0xff]
    %v58 = vld [vmem:[#allocation5 + $0x68] sm:$0xff]
    %v59 = vld [vmem:[#allocation5 + $0x70] sm:$0xff]
    %v60 = vld [vmem:[#allocation5 + $0x78] sm:$0xff]
    %v61 = vld [vmem:[#allocation5 + $0x80] sm:$0xff]
    %v62 = vld [vmem:[#allocation5 + $0x88] sm:$0xff]
    %v63 = vld [vmem:[#allocation5 + $0x90] sm:$0xff]
    %v64 = vld [vmem:[#allocation5 + $0x98] sm:$0xff]
    %v65 = vld [vmem:[#allocation5 + $0xa0] sm:$0xff]
    %v66 = vld [vmem:[#allocation5 + $0xa8] sm:$0xff]
    %v67 = vld [vmem:[#allocation5 + $0xb0] sm:$0xff]
    %v68 = vld [vmem:[#allocation5 + $0xb8] sm:$0xff]
    %v69 = vld [vmem:[#allocation5 + $0xc0] sm:$0xff]
    %v70 = vld [vmem:[#allocation5 + $0xc8] sm:$0xff]
    %v71 = vld [vmem:[#allocation5 + $0xd0] sm:$0xff]
    %v72 = vld [vmem:[#allocation5 + $0xd8] sm:$0xff]
    %v73 = vld [vmem:[#allocation5 + $0xe0] sm:$0xff]
    %v74 = vld [vmem:[#allocation5 + $0xe8] sm:$0xff]
    %v75 = vld [vmem:[#allocation5 + $0xf0] sm:$0xff]
    %v76 = vld [vmem:[#allocation5 + $0xf8] sm:$0xff]
    %v77 = vld [vmem:[#allocation5 + $0x100] sm:$0xff]
    %v78 = vld [vmem:[#allocation5 + $0x108] sm:$0xff]
    %v79 = vld [vmem:[#allocation5 + $0x110] sm:$0xff]
    %v80 = vld [vmem:[#allocation5 + $0x118] sm:$0xff]
    %v81 = vld [vmem:[#allocation5 + $0x120] sm:$0xff]
    %v82 = vld [vmem:[#allocation5 + $0x128] sm:$0xff]
    %v83 = vld [vmem:[#allocation5 + $0x130] sm:$0xff]
    %v84 = vld [vmem:[#allocation5 + $0x138] sm:$0xff]
    %v85 = vld [vmem:[#allocation5 + $0x140] sm:$0xff]
    %v86 = vld [vmem:[#allocation5 + $0x148] sm:$0xff]
    %v87 = vld [vmem:[#allocation5 + $0x150] sm:$0xff]
    %v88 = vld [vmem:[#allocation5 + $0x158] sm:$0xff]
    %v89 = vld [vmem:[#allocation5 + $0x160] sm:$0xff]
    %v90 = vld [vmem:[#allocation5 + $0x168] sm:$0xff]
    %v91 = vld [vmem:[#allocation5 + $0x170] sm:$0xff]
    %v92 = vld [vmem:[#allocation5 + $0x178] sm:$0xff]
    %v93 = vld [vmem:[#allocation5 + $0x180] sm:$0xff]
    %v94 = vld [vmem:[#allocation5 + $0x188] sm:$0xff]
    %v95 = vld [vmem:[#allocation5 + $0x190] sm:$0xff]
    %v96 = vld [vmem:[#allocation5 + $0x198] sm:$0xff]
    %v97 = vld [vmem:[#allocation5 + $0x1a0] sm:$0xff]
    %v98 = vld [vmem:[#allocation5 + $0x1a8] sm:$0xff]
    %v99 = vld [vmem:[#allocation5 + $0x1b0] sm:$0xff]
    %v100 = vld [vmem:[#allocation5 + $0x1b8] sm:$0xff]
    %v101 = vld [vmem:[#allocation5 + $0x1c0] sm:$0xff]
    %v102 = vld [vmem:[#allocation5 + $0x1c8] sm:$0xff]
    %v103 = vld [vmem:[#allocation5 + $0x1d0] sm:$0xff]
    %v104 = vld [vmem:[#allocation5 + $0x1d8] sm:$0xff]
    %v105 = vld [vmem:[#allocation5 + $0x1e0] sm:$0xff]
    %v106 = vld [vmem:[#allocation5 + $0x1e8] sm:$0xff]
    %v107 = vld [vmem:[#allocation5 + $0x1f0] sm:$0xff]
    %v108 = vld [vmem:[#allocation5 + $0x1f8] sm:$0xff]
    %v109 = vld [vmem:[#allocation5 + $0x200] sm:$0xff]
    %v110 = vld [vmem:[#allocation5 + $0x208] sm:$0xff]
    %v111 = vld [vmem:[#allocation5 + $0x210] sm:$0xff]
    %v112 = vld [vmem:[#allocation5 + $0x218] sm:$0xff]
    %v113 = vld [vmem:[#allocation5 + $0x220] sm:$0xff]
    %v114 = vld [vmem:[#allocation5 + $0x228] sm:$0xff]
    %v115 = vld [vmem:[#allocation5 + $0x230] sm:$0xff]
    %v116 = vld [vmem:[#allocation5 + $0x238] sm:$0xff]
    %v117 = vld [vmem:[#allocation5 + $0x240] sm:$0xff]
    %v118 = vld [vmem:[#allocation5 + $0x248] sm:$0xff]
    %v119 = vld [vmem:[#allocation5 + $0x250] sm:$0xff]
    %v120 = vld [vmem:[#allocation5 + $0x258] sm:$0xff]
    %v121 = vld [vmem:[#allocation5 + $0x260] sm:$0xff]
    %v122 = vld [vmem:[#allocation5 + $0x268] sm:$0xff]
    %v123 = vld [vmem:[#allocation5 + $0x270] sm:$0xff]
    %v124 = vld [vmem:[#allocation5 + $0x278] sm:$0xff]
    %v125 = vld [vmem:[#allocation5 + $0x280] sm:$0xff]
    %v126 = vld [vmem:[#allocation5 + $0x288] sm:$0xff]
    %v127 = vld [vmem:[#allocation5 + $0x290] sm:$0xff]
    %v128 = vld [vmem:[#allocation5 + $0x298] sm:$0xff]
    %v129 = vld [vmem:[#allocation5 + $0x2a0] sm:$0xff]
    %v130 = vld [vmem:[#allocation5 + $0x2a8] sm:$0xff]
    %v131 = vld [vmem:[#allocation5 + $0x2b0] sm:$0xff]
    %v132 = vld [vmem:[#allocation5 + $0x2b8] sm:$0xff]
    %v133 = vld [vmem:[#allocation5 + $0x2c0] sm:$0xff]
    %v134 = vld [vmem:[#allocation5 + $0x2c8] sm:$0xff]
    %v135 = vld [vmem:[#allocation5 + $0x2d0] sm:$0xff]
    %v136 = vld [vmem:[#allocation5 + $0x2d8] sm:$0xff]
    %v137 = vld [vmem:[#allocation5 + $0x2e0] sm:$0xff]
    %v138 = vld [vmem:[#allocation5 + $0x2e8] sm:$0xff]
    %v139 = vld [vmem:[#allocation5 + $0x2f0] sm:$0xff]
    %v140 = vld [vmem:[#allocation5 + $0x2f8] sm:$0xff]
    %v141 = vld [vmem:[#allocation5 + $0x300] sm:$0xff]
    %v142 = vld [vmem:[#allocation5 + $0x308] sm:$0xff]
    %v143 = vld [vmem:[#allocation5 + $0x310] sm:$0xff]
    %v144 = vld [vmem:[#allocation5 + $0x318] sm:$0xff]
    %v145 = vld [vmem:[#allocation5 + $0x320] sm:$0xff]
    %v146 = vld [vmem:[#allocation5 + $0x328] sm:$0xff]
    %v147 = vld [vmem:[#allocation5 + $0x330] sm:$0xff]
    %v148 = vld [vmem:[#allocation5 + $0x338] sm:$0xff]
    %v149 = vld [vmem:[#allocation5 + $0x340] sm:$0xff]
    %v150 = vld [vmem:[#allocation5 + $0x348] sm:$0xff]
    %v151 = vld [vmem:[#allocation5 + $0x350] sm:$0xff]
    %v152 = vld [vmem:[#allocation5 + $0x358] sm:$0xff]
    %v153 = vld [vmem:[#allocation5 + $0x360] sm:$0xff]
    %v154 = vld [vmem:[#allocation5 + $0x368] sm:$0xff]
    %v155 = vld [vmem:[#allocation5 + $0x370] sm:$0xff]
    %v156 = vld [vmem:[#allocation5 + $0x378] sm:$0xff]
    %v157 = vld [vmem:[#allocation5 + $0x380] sm:$0xff]
    %v158 = vld [vmem:[#allocation5 + $0x388] sm:$0xff]
    %v159 = vld [vmem:[#allocation5 + $0x390] sm:$0xff]
    %v160 = vld [vmem:[#allocation5 + $0x398] sm:$0xff]
    %v161 = vld [vmem:[#allocation5 + $0x3a0] sm:$0xff]
    %v162 = vld [vmem:[#allocation5 + $0x3a8] sm:$0xff]
    %v163 = vld [vmem:[#allocation5 + $0x3b0] sm:$0xff]
    %v164 = vld [vmem:[#allocation5 + $0x3b8] sm:$0xff]
    %v165 = vld [vmem:[#allocation5 + $0x3c0] sm:$0xff]
    %v166 = vld [vmem:[#allocation5 + $0x3c8] sm:$0xff]
    %v167 = vld [vmem:[#allocation5 + $0x3d0] sm:$0xff]
    %v168 = vld [vmem:[#allocation5 + $0x3d8] sm:$0xff]
    %v169 = vld [vmem:[#allocation5 + $0x3e0] sm:$0xff]
    %v170 = vld [vmem:[#allocation5 + $0x3e8] sm:$0xff]
    %v171 = vld [vmem:[#allocation5 + $0x3f0] sm:$0xff]
    %v172 = vld [vmem:[#allocation5 + $0x3f8] sm:$0xff]
    %v173 = vld [vmem:[#allocation5 + $0x400] sm:$0xff]
    %v174 = vld [vmem:[#allocation5 + $0x408] sm:$0xff]
    %v175 = vld [vmem:[#allocation5 + $0x410] sm:$0xff]
    %v176 = vld [vmem:[#allocation5 + $0x418] sm:$0xff]
    %v177 = vld [vmem:[#allocation5 + $0x420] sm:$0xff]
    %v178 = vld [vmem:[#allocation5 + $0x428] sm:$0xff]
    %v179 = vld [vmem:[#allocation5 + $0x430] sm:$0xff]
    %v180 = vld [vmem:[#allocation5 + $0x438] sm:$0xff]
    %v181 = vld [vmem:[#allocation5 + $0x440] sm:$0xff]
    %v182 = vld [vmem:[#allocation5 + $0x448] sm:$0xff]
    %v183 = vld [vmem:[#allocation5 + $0x450] sm:$0xff]
    %v184 = vld [vmem:[#allocation5 + $0x458] sm:$0xff]
    %v185 = vld [vmem:[#allocation5 + $0x460] sm:$0xff]
    %v186 = vld [vmem:[#allocation5 + $0x468] sm:$0xff]
    %v187 = vld [vmem:[#allocation5 + $0x470] sm:$0xff]
    %v188 = vld [vmem:[#allocation5 + $0x478] sm:$0xff]
    %v189 = vld [vmem:[#allocation5 + $0x480] sm:$0xff]
    %v190 = vld [vmem:[#allocation5 + $0x488] sm:$0xff]
    %v191 = vld [vmem:[#allocation5 + $0x490] sm:$0xff]
    %v192 = vld [vmem:[#allocation5 + $0x498] sm:$0xff]
    %v193 = vld [vmem:[#allocation5 + $0x4a0] sm:$0xff]
    %v194 = vld [vmem:[#allocation5 + $0x4a8] sm:$0xff]
    %v195 = vld [vmem:[#allocation5 + $0x4b0] sm:$0xff]
    %v196 = vld [vmem:[#allocation5 + $0x4b8] sm:$0xff]
    %v197 = vld [vmem:[#allocation5 + $0x4c0] sm:$0xff]
    %v198 = vld [vmem:[#allocation5 + $0x4c8] sm:$0xff]
    %v199 = vld [vmem:[#allocation5 + $0x4d0] sm:$0xff]
    %v200 = vld [vmem:[#allocation5 + $0x4d8] sm:$0xff]
    %v201 = vld [vmem:[#allocation5 + $0x4e0] sm:$0xff]
    %v202 = vld [vmem:[#allocation5 + $0x4e8] sm:$0xff]
    %v203 = vld [vmem:[#allocation5 + $0x4f0] sm:$0xff]
    %v204 = vld [vmem:[#allocation5 + $0x4f8] sm:$0xff]
    %v205 = vld [vmem:[#allocation5 + $0x500] sm:$0xff]
    %v206 = vld [vmem:[#allocation5 + $0x508] sm:$0xff]
    %v207 = vld [vmem:[#allocation5 + $0x510] sm:$0xff]
    %v208 = vld [vmem:[#allocation5 + $0x518] sm:$0xff]
    %v209 = vld [vmem:[#allocation5 + $0x520] sm:$0xff]
    %v210 = vld [vmem:[#allocation5 + $0x528] sm:$0xff]
    %v211 = vld [vmem:[#allocation5 + $0x530] sm:$0xff]
    %v212 = vld [vmem:[#allocation5 + $0x538] sm:$0xff]
    %v213 = vld [vmem:[#allocation5 + $0x540] sm:$0xff]
    %v214 = vld [vmem:[#allocation5 + $0x548] sm:$0xff]
    %v215 = vld [vmem:[#allocation5 + $0x550] sm:$0xff]
    %v216 = vld [vmem:[#allocation5 + $0x558] sm:$0xff]
    %v217 = vld [vmem:[#allocation5 + $0x560] sm:$0xff]
    %v218 = vld [vmem:[#allocation5 + $0x568] sm:$0xff]
    %v219 = vld [vmem:[#allocation5 + $0x570] sm:$0xff]
    %v220 = vld [vmem:[#allocation5 + $0x578] sm:$0xff]
    %v221 = vld [vmem:[#allocation5 + $0x580] sm:$0xff]
    %v222 = vld [vmem:[#allocation5 + $0x588] sm:$0xff]
    %v223 = vld [vmem:[#allocation5 + $0x590] sm:$0xff]
    %v224 = vld [vmem:[#allocation5 + $0x598] sm:$0xff]
    %v225 = vld [vmem:[#allocation5 + $0x5a0] sm:$0xff]
    %v226 = vld [vmem:[#allocation5 + $0x5a8] sm:$0xff]
    %v227 = vld [vmem:[#allocation5 + $0x5b0] sm:$0xff]
    %v228 = vld [vmem:[#allocation5 + $0x5b8] sm:$0xff]
    %v229 = vld [vmem:[#allocation5 + $0x5c0] sm:$0xff]
    %v230 = vld [vmem:[#allocation5 + $0x5c8] sm:$0xff]
    %v231 = vld [vmem:[#allocation5 + $0x5d0] sm:$0xff]
    %v232 = vld [vmem:[#allocation5 + $0x5d8] sm:$0xff]
    %v233 = vld [vmem:[#allocation5 + $0x5e0] sm:$0xff]
    %v234 = vld [vmem:[#allocation5 + $0x5e8] sm:$0xff]
    %v235 = vld [vmem:[#allocation5 + $0x5f0] sm:$0xff]
    %v236 = vld [vmem:[#allocation5 + $0x5f8] sm:$0xff]
    %v237 = vld [vmem:[#allocation5 + $0x600] sm:$0xff]
    %v238 = vld [vmem:[#allocation5 + $0x608] sm:$0xff]
    %v239 = vld [vmem:[#allocation5 + $0x610] sm:$0xff]
    %v240 = vld [vmem:[#allocation5 + $0x618] sm:$0xff]
    %v241 = vld [vmem:[#allocation5 + $0x620] sm:$0xff]
    %v242 = vld [vmem:[#allocation5 + $0x628] sm:$0xff]
    %v243 = vld [vmem:[#allocation5 + $0x630] sm:$0xff]
    %v244 = vld [vmem:[#allocation5 + $0x638] sm:$0xff]
    %v245 = vld [vmem:[#allocation5 + $0x640] sm:$0xff]
    %v246 = vld [vmem:[#allocation5 + $0x648] sm:$0xff]
    %v247 = vld [vmem:[#allocation5 + $0x650] sm:$0xff]
    %v248 = vld [vmem:[#allocation5 + $0x658] sm:$0xff]
    %v249 = vld [vmem:[#allocation5 + $0x660] sm:$0xff]
    %v250 = vld [vmem:[#allocation5 + $0x668] sm:$0xff]
    %v251 = vld [vmem:[#allocation5 + $0x670] sm:$0xff]
    %v252 = vld [vmem:[#allocation5 + $0x678] sm:$0xff]
    %v253 = vld [vmem:[#allocation5 + $0x680] sm:$0xff]
    %v254 = vld [vmem:[#allocation5 + $0x688] sm:$0xff]
    %v255 = vld [vmem:[#allocation5 + $0x690] sm:$0xff]
    %v256 = vld [vmem:[#allocation5 + $0x698] sm:$0xff]
    %v257 = vld [vmem:[#allocation5 + $0x6a0] sm:$0xff]
    %v258 = vld [vmem:[#allocation5 + $0x6a8] sm:$0xff]
    %v259 = vld [vmem:[#allocation5 + $0x6b0] sm:$0xff]
    %v260 = vld [vmem:[#allocation5 + $0x6b8] sm:$0xff]
    %v261 = vld [vmem:[#allocation5 + $0x6c0] sm:$0xff]
    %v262 = vld [vmem:[#allocation5 + $0x6c8] sm:$0xff]
    %v263 = vld [vmem:[#allocation5 + $0x6d0] sm:$0xff]
    %v264 = vld [vmem:[#allocation5 + $0x6d8] sm:$0xff]
    %v265 = vld [vmem:[#allocation5 + $0x6e0] sm:$0xff]
    %v266 = vld [vmem:[#allocation5 + $0x6e8] sm:$0xff]
    %v267 = vld [vmem:[#allocation5 + $0x6f0] sm:$0xff]
    %v268 = vld [vmem:[#allocation5 + $0x6f8] sm:$0xff]
    %v269 = vld [vmem:[#allocation5 + $0x700] sm:$0xff]
    %v270 = vld [vmem:[#allocation5 + $0x708] sm:$0xff]
    %v271 = vld [vmem:[#allocation5 + $0x710] sm:$0xff]
    %v272 = vld [vmem:[#allocation5 + $0x718] sm:$0xff]
    %v273 = vld [vmem:[#allocation5 + $0x720] sm:$0xff]
    %v274 = vld [vmem:[#allocation5 + $0x728] sm:$0xff]
    %v275 = vld [vmem:[#allocation5 + $0x730] sm:$0xff]
    %v276 = vld [vmem:[#allocation5 + $0x738] sm:$0xff]
    %v277 = vld [vmem:[#allocation5 + $0x740] sm:$0xff]
    %v278 = vld [vmem:[#allocation5 + $0x748] sm:$0xff]
    %v279 = vld [vmem:[#allocation5 + $0x750] sm:$0xff]
    %v280 = vld [vmem:[#allocation5 + $0x758] sm:$0xff]
    %v281 = vld [vmem:[#allocation5 + $0x760] sm:$0xff]
    %v282 = vld [vmem:[#allocation5 + $0x768] sm:$0xff]
    %v283 = vld [vmem:[#allocation5 + $0x770] sm:$0xff]
    %v284 = vld [vmem:[#allocation5 + $0x778] sm:$0xff]
    %v285 = vld [vmem:[#allocation5 + $0x780] sm:$0xff]
    %v286 = vld [vmem:[#allocation5 + $0x788] sm:$0xff]
    %v287 = vld [vmem:[#allocation5 + $0x790] sm:$0xff]
    %v288 = vld [vmem:[#allocation5 + $0x798] sm:$0xff]
    %v289 = vld [vmem:[#allocation5 + $0x7a0] sm:$0xff]
    %v290 = vld [vmem:[#allocation5 + $0x7a8] sm:$0xff]
    %v291 = vld [vmem:[#allocation5 + $0x7b0] sm:$0xff]
    %v292 = vld [vmem:[#allocation5 + $0x7b8] sm:$0xff]
    %v293 = vld [vmem:[#allocation5 + $0x7c0] sm:$0xff]
    %v294 = vld [vmem:[#allocation5 + $0x7c8] sm:$0xff]
    %v295 = vld [vmem:[#allocation5 + $0x7d0] sm:$0xff]
    %v296 = vld [vmem:[#allocation5 + $0x7d8] sm:$0xff]
    %v297 = vld [vmem:[#allocation5 + $0x7e0] sm:$0xff]
    %v298 = vld [vmem:[#allocation5 + $0x7e8] sm:$0xff]
    %v299 = vld [vmem:[#allocation5 + $0x7f0] sm:$0xff]
    %v300 = vld [vmem:[#allocation5 + $0x7f8] sm:$0xff]
    %v301 = vld [vmem:[%s2] sm:$0x1]
    %v303 = vlaneseq
    %v304 = vshrl.u32 %v303, 7
    %v305 = vsub.s32 0, %v304
    %v306 = vrot.slane %v301, %v305
    %v312 = vcombine.high %v41, %v41
    %v314 = vunpack.c.l.s4 1983009808
    %v315 = vunpack.c.0.s8 %v314
    %v316 = vlaneseq
    %v317 = vshrl.u32 %v316, 7
    %v318 = vsub.s32 %v315, %v317
    %v319 = vrot.slane %v41, %v318
    %v321 = vunpack.c.l.s4 1983009808
    %v322 = vunpack.c.0.s8 %v321
    %v323 = vlaneseq
    %v324 = vshrl.u32 %v323, 7
    %v325 = vsub.s32 %v322, %v324
    %v326 = vrot.slane %v312, %v325
    %v327 = vcombine.high %v319, %v319
    %v328 = vcombine.high %v326, %v326
    %v329 = vcombine.high %v42, %v42
    %v331 = vunpack.c.l.s4 1983009808
    %v332 = vunpack.c.0.s8 %v331
    %v333 = vlaneseq
    %v334 = vshrl.u32 %v333, 7
    %v335 = vsub.s32 %v332, %v334
    %v336 = vrot.slane %v42, %v335
    %v338 = vunpack.c.l.s4 1983009808
    %v339 = vunpack.c.0.s8 %v338
    %v340 = vlaneseq
    %v341 = vshrl.u32 %v340, 7
    %v342 = vsub.s32 %v339, %v341
    %v343 = vrot.slane %v329, %v342
    %v344 = vcombine.high %v336, %v336
    %v345 = vcombine.high %v343, %v343
    %v346 = vcombine.high %v43, %v43
    %v348 = vunpack.c.l.s4 1983009808
    %v349 = vunpack.c.0.s8 %v348
    %v350 = vlaneseq
    %v351 = vshrl.u32 %v350, 7
    %v352 = vsub.s32 %v349, %v351
    %v353 = vrot.slane %v43, %v352
    %v355 = vunpack.c.l.s4 1983009808
    %v356 = vunpack.c.0.s8 %v355
    %v357 = vlaneseq
    %v358 = vshrl.u32 %v357, 7
    %v359 = vsub.s32 %v356, %v358
    %v360 = vrot.slane %v346, %v359
    %v361 = vcombine.high %v353, %v353
    %v362 = vcombine.high %v360, %v360
    %v363 = vcombine.high %v44, %v44
    %v365 = vunpack.c.l.s4 1983009808
    %v366 = vunpack.c.0.s8 %v365
    %v367 = vlaneseq
    %v368 = vshrl.u32 %v367, 7
    %v369 = vsub.s32 %v366, %v368
    %v370 = vrot.slane %v44, %v369
    %v372 = vunpack.c.l.s4 1983009808
    %v373 = vunpack.c.0.s8 %v372
    %v374 = vlaneseq
    %v375 = vshrl.u32 %v374, 7
    %v376 = vsub.s32 %v373, %v375
    %v377 = vrot.slane %v363, %v376
    %v378 = vcombine.high %v370, %v370
    %v379 = vcombine.high %v377, %v377
    %396 = vmatprep.subr.mxu0 0.0
    %397 = vmatpush1.msra.mxu0 %v60
    %398 = vmatprep.subr.mxu0 0.0
    %399 = vmatpush1.msra.mxu0 %v59
    %400 = vmatprep.subr.mxu0 0.0
    %401 = vmatpush1.msra.mxu0 %v58
    %402 = vmatprep.subr.mxu0 0.0
    %403 = vmatpush1.msra.mxu0 %v57
    %404 = vmatprep.subr.mxu0 0.0
    %405 = vmatpush1.msra.mxu0 %v56
    %406 = vmatprep.subr.mxu0 0.0
    %407 = vmatpush1.msra.mxu0 %v55
    %408 = vmatprep.subr.mxu0 0.0
    %409 = vmatpush1.msra.mxu0 %v54
    %410 = vmatprep.subr.mxu0 0.0
    %411 = vmatpush1.msra.mxu0 %v53
    %412 = vmatprep.subr.mxu0 0.0
    %413 = vmatpush1.msra.mxu0 %v52
    %414 = vmatprep.subr.mxu0 0.0
    %415 = vmatpush1.msra.mxu0 %v51
    %416 = vmatprep.subr.mxu0 0.0
    %417 = vmatpush1.msra.mxu0 %v50
    %418 = vmatprep.subr.mxu0 0.0
    %419 = vmatpush1.msra.mxu0 %v49
    %420 = vmatprep.subr.mxu0 0.0
    %421 = vmatpush1.msra.mxu0 %v48
    %422 = vmatprep.subr.mxu0 0.0
    %423 = vmatpush1.msra.mxu0 %v47
    %424 = vmatprep.subr.mxu0 0.0
    %425 = vmatpush1.msra.mxu0 %v46
    %426 = vmatprep.subr.mxu0 0.0
    %427 = vmatpush1.msra.mxu0 %v45
    %428 = vmatprep.subr.mxu0 0.0
    %429 = vmatpush2.msra.mxu0 %v76
    %430 = vmatprep.subr.mxu0 0.0
    %431 = vmatpush2.msra.mxu0 %v75
    %432 = vmatprep.subr.mxu0 0.0
    %433 = vmatpush2.msra.mxu0 %v74
    %434 = vmatprep.subr.mxu0 0.0
    %435 = vmatpush2.msra.mxu0 %v73
    %436 = vmatprep.subr.mxu0 0.0
    %437 = vmatpush2.msra.mxu0 %v72
    %438 = vmatprep.subr.mxu0 0.0
    %439 = vmatpush2.msra.mxu0 %v71
    %440 = vmatprep.subr.mxu0 0.0
    %441 = vmatpush2.msra.mxu0 %v70
    %442 = vmatprep.subr.mxu0 0.0
    %443 = vmatpush2.msra.mxu0 %v69
    %444 = vmatprep.subr.mxu0 0.0
    %445 = vmatpush2.msra.mxu0 %v68
    %446 = vmatprep.subr.mxu0 0.0
    %447 = vmatpush2.msra.mxu0 %v67
    %448 = vmatprep.subr.mxu0 0.0
    %449 = vmatpush2.msra.mxu0 %v66
    %450 = vmatprep.subr.mxu0 0.0
    %451 = vmatpush2.msra.mxu0 %v65
    %452 = vmatprep.subr.mxu0 0.0
    %453 = vmatpush2.msra.mxu0 %v64
    %454 = vmatprep.subr.mxu0 0.0
    %455 = vmatpush2.msra.mxu0 %v63
    %456 = vmatprep.subr.mxu0 0.0
    %457 = vmatpush2.msra.mxu0 %v62
    %458 = vmatprep.subr.mxu0 0.0
    %459 = vmatpush2.msra.mxu0 %v61
    %460 = vmatprep.mubr.f32.mxu0 %v327
    %461 = vmatmul.mubr.f32.gmra.mxu0 %v319
    %v462 = vpop.f32.mrf.mxu0
    %v463 = vadd.f32 %v306, %v462
    %v464 = vpop.f32.mrf.mxu0
    %465 = vdwg.mxu0
    %466 = vmatprep.subr.mxu0 0.0
    %467 = vmatpush1.msra.mxu0 %v92
    %468 = vmatprep.subr.mxu0 0.0
    %469 = vmatpush1.msra.mxu0 %v91
    %470 = vmatprep.subr.mxu0 0.0
    %471 = vmatpush1.msra.mxu0 %v90
    %472 = vmatprep.subr.mxu0 0.0
    %473 = vmatpush1.msra.mxu0 %v89
    %474 = vmatprep.subr.mxu0 0.0
    %475 = vmatpush1.msra.mxu0 %v88
    %476 = vmatprep.subr.mxu0 0.0
    %477 = vmatpush1.msra.mxu0 %v87
    %478 = vmatprep.subr.mxu0 0.0
    %479 = vmatpush1.msra.mxu0 %v86
    %480 = vmatprep.subr.mxu0 0.0
    %481 = vmatpush1.msra.mxu0 %v85
    %482 = vmatprep.subr.mxu0 0.0
    %483 = vmatpush1.msra.mxu0 %v84
    %484 = vmatprep.subr.mxu0 0.0
    %485 = vmatpush1.msra.mxu0 %v83
    %486 = vmatprep.subr.mxu0 0.0
    %487 = vmatpush1.msra.mxu0 %v82
    %488 = vmatprep.subr.mxu0 0.0
    %489 = vmatpush1.msra.mxu0 %v81
    %490 = vmatprep.subr.mxu0 0.0
    %491 = vmatpush1.msra.mxu0 %v80
    %492 = vmatprep.subr.mxu0 0.0
    %493 = vmatpush1.msra.mxu0 %v79
    %494 = vmatprep.subr.mxu0 0.0
    %495 = vmatpush1.msra.mxu0 %v78
    %496 = vmatprep.subr.mxu0 0.0
    %497 = vmatpush1.msra.mxu0 %v77
    %498 = vmatprep.subr.mxu0 0.0
    %499 = vmatpush2.msra.mxu0 %v108
    %500 = vmatprep.subr.mxu0 0.0
    %501 = vmatpush2.msra.mxu0 %v107
    %502 = vmatprep.subr.mxu0 0.0
    %503 = vmatpush2.msra.mxu0 %v106
    %504 = vmatprep.subr.mxu0 0.0
    %505 = vmatpush2.msra.mxu0 %v105
    %506 = vmatprep.subr.mxu0 0.0
    %507 = vmatpush2.msra.mxu0 %v104
    %508 = vmatprep.subr.mxu0 0.0
    %509 = vmatpush2.msra.mxu0 %v103
    %510 = vmatprep.subr.mxu0 0.0
    %511 = vmatpush2.msra.mxu0 %v102
    %512 = vmatprep.subr.mxu0 0.0
    %513 = vmatpush2.msra.mxu0 %v101
    %514 = vmatprep.subr.mxu0 0.0
    %515 = vmatpush2.msra.mxu0 %v100
    %516 = vmatprep.subr.mxu0 0.0
    %517 = vmatpush2.msra.mxu0 %v99
    %518 = vmatprep.subr.mxu0 0.0
    %519 = vmatpush2.msra.mxu0 %v98
    %520 = vmatprep.subr.mxu0 0.0
    %521 = vmatpush2.msra.mxu0 %v97
    %522 = vmatprep.subr.mxu0 0.0
    %523 = vmatpush2.msra.mxu0 %v96
    %524 = vmatprep.subr.mxu0 0.0
    %525 = vmatpush2.msra.mxu0 %v95
    %526 = vmatprep.subr.mxu0 0.0
    %527 = vmatpush2.msra.mxu0 %v94
    %528 = vmatprep.subr.mxu0 0.0
    %529 = vmatpush2.msra.mxu0 %v93
    %530 = vmatprep.mubr.f32.mxu0 %v328
    %531 = vmatmul.mubr.f32.gmra.mxu0 %v326
    %v532 = vpop.f32.mrf.mxu0
    %v533 = vadd.f32 %v463, %v532
    %v534 = vpop.f32.mrf.mxu0
    %535 = vdwg.mxu0
    %536 = vmatprep.subr.mxu0 0.0
    %537 = vmatpush1.msra.mxu0 %v124
    %538 = vmatprep.subr.mxu0 0.0
    %539 = vmatpush1.msra.mxu0 %v123
    %540 = vmatprep.subr.mxu0 0.0
    %541 = vmatpush1.msra.mxu0 %v122
    %542 = vmatprep.subr.mxu0 0.0
    %543 = vmatpush1.msra.mxu0 %v121
    %544 = vmatprep.subr.mxu0 0.0
    %545 = vmatpush1.msra.mxu0 %v120
    %546 = vmatprep.subr.mxu0 0.0
    %547 = vmatpush1.msra.mxu0 %v119
    %548 = vmatprep.subr.mxu0 0.0
    %549 = vmatpush1.msra.mxu0 %v118
    %550 = vmatprep.subr.mxu0 0.0
    %551 = vmatpush1.msra.mxu0 %v117
    %552 = vmatprep.subr.mxu0 0.0
    %553 = vmatpush1.msra.mxu0 %v116
    %554 = vmatprep.subr.mxu0 0.0
    %555 = vmatpush1.msra.mxu0 %v115
    %556 = vmatprep.subr.mxu0 0.0
    %557 = vmatpush1.msra.mxu0 %v114
    %558 = vmatprep.subr.mxu0 0.0
    %559 = vmatpush1.msra.mxu0 %v113
    %560 = vmatprep.subr.mxu0 0.0
    %561 = vmatpush1.msra.mxu0 %v112
    %562 = vmatprep.subr.mxu0 0.0
    %563 = vmatpush1.msra.mxu0 %v111
    %564 = vmatprep.subr.mxu0 0.0
    %565 = vmatpush1.msra.mxu0 %v110
    %566 = vmatprep.subr.mxu0 0.0
    %567 = vmatpush1.msra.mxu0 %v109
    %568 = vmatprep.subr.mxu0 0.0
    %569 = vmatpush2.msra.mxu0 %v140
    %570 = vmatprep.subr.mxu0 0.0
    %571 = vmatpush2.msra.mxu0 %v139
    %572 = vmatprep.subr.mxu0 0.0
    %573 = vmatpush2.msra.mxu0 %v138
    %574 = vmatprep.subr.mxu0 0.0
    %575 = vmatpush2.msra.mxu0 %v137
    %576 = vmatprep.subr.mxu0 0.0
    %577 = vmatpush2.msra.mxu0 %v136
    %578 = vmatprep.subr.mxu0 0.0
    %579 = vmatpush2.msra.mxu0 %v135
    %580 = vmatprep.subr.mxu0 0.0
    %581 = vmatpush2.msra.mxu0 %v134
    %582 = vmatprep.subr.mxu0 0.0
    %583 = vmatpush2.msra.mxu0 %v133
    %584 = vmatprep.subr.mxu0 0.0
    %585 = vmatpush2.msra.mxu0 %v132
    %586 = vmatprep.subr.mxu0 0.0
    %587 = vmatpush2.msra.mxu0 %v131
    %588 = vmatprep.subr.mxu0 0.0
    %589 = vmatpush2.msra.mxu0 %v130
    %590 = vmatprep.subr.mxu0 0.0
    %591 = vmatpush2.msra.mxu0 %v129
    %592 = vmatprep.subr.mxu0 0.0
    %593 = vmatpush2.msra.mxu0 %v128
    %594 = vmatprep.subr.mxu0 0.0
    %595 = vmatpush2.msra.mxu0 %v127
    %596 = vmatprep.subr.mxu0 0.0
    %597 = vmatpush2.msra.mxu0 %v126
    %598 = vmatprep.subr.mxu0 0.0
    %599 = vmatpush2.msra.mxu0 %v125
    %600 = vmatprep.mubr.f32.mxu0 %v344
    %601 = vmatmul.mubr.f32.gmra.mxu0 %v336
    %v602 = vpop.f32.mrf.mxu0
    %v603 = vadd.f32 %v533, %v602
    %v604 = vpop.f32.mrf.mxu0
    %605 = vdwg.mxu0
    %606 = vmatprep.subr.mxu0 0.0
    %607 = vmatpush1.msra.mxu0 %v156
    %608 = vmatprep.subr.mxu0 0.0
    %609 = vmatpush1.msra.mxu0 %v155
    %610 = vmatprep.subr.mxu0 0.0
    %611 = vmatpush1.msra.mxu0 %v154
    %612 = vmatprep.subr.mxu0 0.0
    %613 = vmatpush1.msra.mxu0 %v153
    %614 = vmatprep.subr.mxu0 0.0
    %615 = vmatpush1.msra.mxu0 %v152
    %616 = vmatprep.subr.mxu0 0.0
    %617 = vmatpush1.msra.mxu0 %v151
    %618 = vmatprep.subr.mxu0 0.0
    %619 = vmatpush1.msra.mxu0 %v150
    %620 = vmatprep.subr.mxu0 0.0
    %621 = vmatpush1.msra.mxu0 %v149
    %622 = vmatprep.subr.mxu0 0.0
    %623 = vmatpush1.msra.mxu0 %v148
    %624 = vmatprep.subr.mxu0 0.0
    %625 = vmatpush1.msra.mxu0 %v147
    %626 = vmatprep.subr.mxu0 0.0
    %627 = vmatpush1.msra.mxu0 %v146
    %628 = vmatprep.subr.mxu0 0.0
    %629 = vmatpush1.msra.mxu0 %v145
    %630 = vmatprep.subr.mxu0 0.0
    %631 = vmatpush1.msra.mxu0 %v144
    %632 = vmatprep.subr.mxu0 0.0
    %633 = vmatpush1.msra.mxu0 %v143
    %634 = vmatprep.subr.mxu0 0.0
    %635 = vmatpush1.msra.mxu0 %v142
    %636 = vmatprep.subr.mxu0 0.0
    %637 = vmatpush1.msra.mxu0 %v141
    %638 = vmatprep.subr.mxu0 0.0
    %639 = vmatpush2.msra.mxu0 %v172
    %640 = vmatprep.subr.mxu0 0.0
    %641 = vmatpush2.msra.mxu0 %v171
    %642 = vmatprep.subr.mxu0 0.0
    %643 = vmatpush2.msra.mxu0 %v170
    %644 = vmatprep.subr.mxu0 0.0
    %645 = vmatpush2.msra.mxu0 %v169
    %646 = vmatprep.subr.mxu0 0.0
    %647 = vmatpush2.msra.mxu0 %v168
    %648 = vmatprep.subr.mxu0 0.0
    %649 = vmatpush2.msra.mxu0 %v167
    %650 = vmatprep.subr.mxu0 0.0
    %651 = vmatpush2.msra.mxu0 %v166
    %652 = vmatprep.subr.mxu0 0.0
    %653 = vmatpush2.msra.mxu0 %v165
    %654 = vmatprep.subr.mxu0 0.0
    %655 = vmatpush2.msra.mxu0 %v164
    %656 = vmatprep.subr.mxu0 0.0
    %657 = vmatpush2.msra.mxu0 %v163
    %658 = vmatprep.subr.mxu0 0.0
    %659 = vmatpush2.msra.mxu0 %v162
    %660 = vmatprep.subr.mxu0 0.0
    %661 = vmatpush2.msra.mxu0 %v161
    %662 = vmatprep.subr.mxu0 0.0
    %663 = vmatpush2.msra.mxu0 %v160
    %664 = vmatprep.subr.mxu0 0.0
    %665 = vmatpush2.msra.mxu0 %v159
    %666 = vmatprep.subr.mxu0 0.0
    %667 = vmatpush2.msra.mxu0 %v158
    %668 = vmatprep.subr.mxu0 0.0
    %669 = vmatpush2.msra.mxu0 %v157
    %670 = vmatprep.mubr.f32.mxu0 %v345
    %671 = vmatmul.mubr.f32.gmra.mxu0 %v343
    %v672 = vpop.f32.mrf.mxu0
    %v673 = vadd.f32 %v603, %v672
    %v674 = vpop.f32.mrf.mxu0
    %675 = vdwg.mxu0
    %676 = vmatprep.subr.mxu0 0.0
    %677 = vmatpush1.msra.mxu0 %v188
    %678 = vmatprep.subr.mxu0 0.0
    %679 = vmatpush1.msra.mxu0 %v187
    %680 = vmatprep.subr.mxu0 0.0
    %681 = vmatpush1.msra.mxu0 %v186
    %682 = vmatprep.subr.mxu0 0.0
    %683 = vmatpush1.msra.mxu0 %v185
    %684 = vmatprep.subr.mxu0 0.0
    %685 = vmatpush1.msra.mxu0 %v184
    %686 = vmatprep.subr.mxu0 0.0
    %687 = vmatpush1.msra.mxu0 %v183
    %688 = vmatprep.subr.mxu0 0.0
    %689 = vmatpush1.msra.mxu0 %v182
    %690 = vmatprep.subr.mxu0 0.0
    %691 = vmatpush1.msra.mxu0 %v181
    %692 = vmatprep.subr.mxu0 0.0
    %693 = vmatpush1.msra.mxu0 %v180
    %694 = vmatprep.subr.mxu0 0.0
    %695 = vmatpush1.msra.mxu0 %v179
    %696 = vmatprep.subr.mxu0 0.0
    %697 = vmatpush1.msra.mxu0 %v178
    %698 = vmatprep.subr.mxu0 0.0
    %699 = vmatpush1.msra.mxu0 %v177
    %700 = vmatprep.subr.mxu0 0.0
    %701 = vmatpush1.msra.mxu0 %v176
    %702 = vmatprep.subr.mxu0 0.0
    %703 = vmatpush1.msra.mxu0 %v175
    %704 = vmatprep.subr.mxu0 0.0
    %705 = vmatpush1.msra.mxu0 %v174
    %706 = vmatprep.subr.mxu0 0.0
    %707 = vmatpush1.msra.mxu0 %v173
    %708 = vmatprep.subr.mxu0 0.0
    %709 = vmatpush2.msra.mxu0 %v204
    %710 = vmatprep.subr.mxu0 0.0
    %711 = vmatpush2.msra.mxu0 %v203
    %712 = vmatprep.subr.mxu0 0.0
    %713 = vmatpush2.msra.mxu0 %v202
    %714 = vmatprep.subr.mxu0 0.0
    %715 = vmatpush2.msra.mxu0 %v201
    %716 = vmatprep.subr.mxu0 0.0
    %717 = vmatpush2.msra.mxu0 %v200
    %718 = vmatprep.subr.mxu0 0.0
    %719 = vmatpush2.msra.mxu0 %v199
    %720 = vmatprep.subr.mxu0 0.0
    %721 = vmatpush2.msra.mxu0 %v198
    %722 = vmatprep.subr.mxu0 0.0
    %723 = vmatpush2.msra.mxu0 %v197
    %724 = vmatprep.subr.mxu0 0.0
    %725 = vmatpush2.msra.mxu0 %v196
    %726 = vmatprep.subr.mxu0 0.0
    %727 = vmatpush2.msra.mxu0 %v195
    %728 = vmatprep.subr.mxu0 0.0
    %729 = vmatpush2.msra.mxu0 %v194
    %730 = vmatprep.subr.mxu0 0.0
    %731 = vmatpush2.msra.mxu0 %v193
    %732 = vmatprep.subr.mxu0 0.0
    %733 = vmatpush2.msra.mxu0 %v192
    %734 = vmatprep.subr.mxu0 0.0
    %735 = vmatpush2.msra.mxu0 %v191
    %736 = vmatprep.subr.mxu0 0.0
    %737 = vmatpush2.msra.mxu0 %v190
    %738 = vmatprep.subr.mxu0 0.0
    %739 = vmatpush2.msra.mxu0 %v189
    %740 = vmatprep.mubr.f32.mxu0 %v361
    %741 = vmatmul.mubr.f32.gmra.mxu0 %v353
    %v742 = vpop.f32.mrf.mxu0
    %v743 = vadd.f32 %v673, %v742
    %v744 = vpop.f32.mrf.mxu0
    %745 = vdwg.mxu0
    %746 = vmatprep.subr.mxu0 0.0
    %747 = vmatpush1.msra.mxu0 %v220
    %748 = vmatprep.subr.mxu0 0.0
    %749 = vmatpush1.msra.mxu0 %v219
    %750 = vmatprep.subr.mxu0 0.0
    %751 = vmatpush1.msra.mxu0 %v218
    %752 = vmatprep.subr.mxu0 0.0
    %753 = vmatpush1.msra.mxu0 %v217
    %754 = vmatprep.subr.mxu0 0.0
    %755 = vmatpush1.msra.mxu0 %v216
    %756 = vmatprep.subr.mxu0 0.0
    %757 = vmatpush1.msra.mxu0 %v215
    %758 = vmatprep.subr.mxu0 0.0
    %759 = vmatpush1.msra.mxu0 %v214
    %760 = vmatprep.subr.mxu0 0.0
    %761 = vmatpush1.msra.mxu0 %v213
    %762 = vmatprep.subr.mxu0 0.0
    %763 = vmatpush1.msra.mxu0 %v212
    %764 = vmatprep.subr.mxu0 0.0
    %765 = vmatpush1.msra.mxu0 %v211
    %766 = vmatprep.subr.mxu0 0.0
    %767 = vmatpush1.msra.mxu0 %v210
    %768 = vmatprep.subr.mxu0 0.0
    %769 = vmatpush1.msra.mxu0 %v209
    %770 = vmatprep.subr.mxu0 0.0
    %771 = vmatpush1.msra.mxu0 %v208
    %772 = vmatprep.subr.mxu0 0.0
    %773 = vmatpush1.msra.mxu0 %v207
    %774 = vmatprep.subr.mxu0 0.0
    %775 = vmatpush1.msra.mxu0 %v206
    %776 = vmatprep.subr.mxu0 0.0
    %777 = vmatpush1.msra.mxu0 %v205
    %778 = vmatprep.subr.mxu0 0.0
    %779 = vmatpush2.msra.mxu0 %v236
    %780 = vmatprep.subr.mxu0 0.0
    %781 = vmatpush2.msra.mxu0 %v235
    %782 = vmatprep.subr.mxu0 0.0
    %783 = vmatpush2.msra.mxu0 %v234
    %784 = vmatprep.subr.mxu0 0.0
    %785 = vmatpush2.msra.mxu0 %v233
    %786 = vmatprep.subr.mxu0 0.0
    %787 = vmatpush2.msra.mxu0 %v232
    %788 = vmatprep.subr.mxu0 0.0
    %789 = vmatpush2.msra.mxu0 %v231
    %790 = vmatprep.subr.mxu0 0.0
    %791 = vmatpush2.msra.mxu0 %v230
    %792 = vmatprep.subr.mxu0 0.0
    %793 = vmatpush2.msra.mxu0 %v229
    %794 = vmatprep.subr.mxu0 0.0
    %795 = vmatpush2.msra.mxu0 %v228
    %796 = vmatprep.subr.mxu0 0.0
    %797 = vmatpush2.msra.mxu0 %v227
    %798 = vmatprep.subr.mxu0 0.0
    %799 = vmatpush2.msra.mxu0 %v226
    %800 = vmatprep.subr.mxu0 0.0
    %801 = vmatpush2.msra.mxu0 %v225
    %802 = vmatprep.subr.mxu0 0.0
    %803 = vmatpush2.msra.mxu0 %v224
    %804 = vmatprep.subr.mxu0 0.0
    %805 = vmatpush2.msra.mxu0 %v223
    %806 = vmatprep.subr.mxu0 0.0
    %807 = vmatpush2.msra.mxu0 %v222
    %808 = vmatprep.subr.mxu0 0.0
    %809 = vmatpush2.msra.mxu0 %v221
    %810 = vmatprep.mubr.f32.mxu0 %v362
    %811 = vmatmul.mubr.f32.gmra.mxu0 %v360
    %v812 = vpop.f32.mrf.mxu0
    %v813 = vadd.f32 %v743, %v812
    %v814 = vpop.f32.mrf.mxu0
    %815 = vdwg.mxu0
    %816 = vmatprep.subr.mxu0 0.0
    %817 = vmatpush1.msra.mxu0 %v252
    %818 = vmatprep.subr.mxu0 0.0
    %819 = vmatpush1.msra.mxu0 %v251
    %820 = vmatprep.subr.mxu0 0.0
    %821 = vmatpush1.msra.mxu0 %v250
    %822 = vmatprep.subr.mxu0 0.0
    %823 = vmatpush1.msra.mxu0 %v249
    %824 = vmatprep.subr.mxu0 0.0
    %825 = vmatpush1.msra.mxu0 %v248
    %826 = vmatprep.subr.mxu0 0.0
    %827 = vmatpush1.msra.mxu0 %v247
    %828 = vmatprep.subr.mxu0 0.0
    %829 = vmatpush1.msra.mxu0 %v246
    %830 = vmatprep.subr.mxu0 0.0
    %831 = vmatpush1.msra.mxu0 %v245
    %832 = vmatprep.subr.mxu0 0.0
    %833 = vmatpush1.msra.mxu0 %v244
    %834 = vmatprep.subr.mxu0 0.0
    %835 = vmatpush1.msra.mxu0 %v243
    %836 = vmatprep.subr.mxu0 0.0
    %837 = vmatpush1.msra.mxu0 %v242
    %838 = vmatprep.subr.mxu0 0.0
    %839 = vmatpush1.msra.mxu0 %v241
    %840 = vmatprep.subr.mxu0 0.0
    %841 = vmatpush1.msra.mxu0 %v240
    %842 = vmatprep.subr.mxu0 0.0
    %843 = vmatpush1.msra.mxu0 %v239
    %844 = vmatprep.subr.mxu0 0.0
    %845 = vmatpush1.msra.mxu0 %v238
    %846 = vmatprep.subr.mxu0 0.0
    %847 = vmatpush1.msra.mxu0 %v237
    %848 = vmatprep.subr.mxu0 0.0
    %849 = vmatpush2.msra.mxu0 %v268
    %850 = vmatprep.subr.mxu0 0.0
    %851 = vmatpush2.msra.mxu0 %v267
    %852 = vmatprep.subr.mxu0 0.0
    %853 = vmatpush2.msra.mxu0 %v266
    %854 = vmatprep.subr.mxu0 0.0
    %855 = vmatpush2.msra.mxu0 %v265
    %856 = vmatprep.subr.mxu0 0.0
    %857 = vmatpush2.msra.mxu0 %v264
    %858 = vmatprep.subr.mxu0 0.0
    %859 = vmatpush2.msra.mxu0 %v263
    %860 = vmatprep.subr.mxu0 0.0
    %861 = vmatpush2.msra.mxu0 %v262
    %862 = vmatprep.subr.mxu0 0.0
    %863 = vmatpush2.msra.mxu0 %v261
    %864 = vmatprep.subr.mxu0 0.0
    %865 = vmatpush2.msra.mxu0 %v260
    %866 = vmatprep.subr.mxu0 0.0
    %867 = vmatpush2.msra.mxu0 %v259
    %868 = vmatprep.subr.mxu0 0.0
    %869 = vmatpush2.msra.mxu0 %v258
    %870 = vmatprep.subr.mxu0 0.0
    %871 = vmatpush2.msra.mxu0 %v257
    %872 = vmatprep.subr.mxu0 0.0
    %873 = vmatpush2.msra.mxu0 %v256
    %874 = vmatprep.subr.mxu0 0.0
    %875 = vmatpush2.msra.mxu0 %v255
    %876 = vmatprep.subr.mxu0 0.0
    %877 = vmatpush2.msra.mxu0 %v254
    %878 = vmatprep.subr.mxu0 0.0
    %879 = vmatpush2.msra.mxu0 %v253
    %880 = vmatprep.mubr.f32.mxu0 %v378
    %881 = vmatmul.mubr.f32.gmra.mxu0 %v370
    %v882 = vpop.f32.mrf.mxu0
    %v883 = vadd.f32 %v813, %v882
    %v884 = vpop.f32.mrf.mxu0
    %885 = vdwg.mxu0
    %886 = vmatprep.subr.mxu0 0.0
    %887 = vmatpush1.msra.mxu0 %v284
    %888 = vmatprep.subr.mxu0 0.0
    %889 = vmatpush1.msra.mxu0 %v283
    %890 = vmatprep.subr.mxu0 0.0
    %891 = vmatpush1.msra.mxu0 %v282
    %892 = vmatprep.subr.mxu0 0.0
    %893 = vmatpush1.msra.mxu0 %v281
    %894 = vmatprep.subr.mxu0 0.0
    %895 = vmatpush1.msra.mxu0 %v280
    %896 = vmatprep.subr.mxu0 0.0
    %897 = vmatpush1.msra.mxu0 %v279
    %898 = vmatprep.subr.mxu0 0.0
    %899 = vmatpush1.msra.mxu0 %v278
    %900 = vmatprep.subr.mxu0 0.0
    %901 = vmatpush1.msra.mxu0 %v277
    %902 = vmatprep.subr.mxu0 0.0
    %903 = vmatpush1.msra.mxu0 %v276
    %904 = vmatprep.subr.mxu0 0.0
    %905 = vmatpush1.msra.mxu0 %v275
    %906 = vmatprep.subr.mxu0 0.0
    %907 = vmatpush1.msra.mxu0 %v274
    %908 = vmatprep.subr.mxu0 0.0
    %909 = vmatpush1.msra.mxu0 %v273
    %910 = vmatprep.subr.mxu0 0.0
    %911 = vmatpush1.msra.mxu0 %v272
    %912 = vmatprep.subr.mxu0 0.0
    %913 = vmatpush1.msra.mxu0 %v271
    %914 = vmatprep.subr.mxu0 0.0
    %915 = vmatpush1.msra.mxu0 %v270
    %916 = vmatprep.subr.mxu0 0.0
    %917 = vmatpush1.msra.mxu0 %v269
    %918 = vmatprep.subr.mxu0 0.0
    %919 = vmatpush2.msra.mxu0 %v300
    %920 = vmatprep.subr.mxu0 0.0
    %921 = vmatpush2.msra.mxu0 %v299
    %922 = vmatprep.subr.mxu0 0.0
    %923 = vmatpush2.msra.mxu0 %v298
    %924 = vmatprep.subr.mxu0 0.0
    %925 = vmatpush2.msra.mxu0 %v297
    %926 = vmatprep.subr.mxu0 0.0
    %927 = vmatpush2.msra.mxu0 %v296
    %928 = vmatprep.subr.mxu0 0.0
    %929 = vmatpush2.msra.mxu0 %v295
    %930 = vmatprep.subr.mxu0 0.0
    %931 = vmatpush2.msra.mxu0 %v294
    %932 = vmatprep.subr.mxu0 0.0
    %933 = vmatpush2.msra.mxu0 %v293
    %934 = vmatprep.subr.mxu0 0.0
    %935 = vmatpush2.msra.mxu0 %v292
    %936 = vmatprep.subr.mxu0 0.0
    %937 = vmatpush2.msra.mxu0 %v291
    %938 = vmatprep.subr.mxu0 0.0
    %939 = vmatpush2.msra.mxu0 %v290
    %940 = vmatprep.subr.mxu0 0.0
    %941 = vmatpush2.msra.mxu0 %v289
    %942 = vmatprep.subr.mxu0 0.0
    %943 = vmatpush2.msra.mxu0 %v288
    %944 = vmatprep.subr.mxu0 0.0
    %945 = vmatpush2.msra.mxu0 %v287
    %946 = vmatprep.subr.mxu0 0.0
    %947 = vmatpush2.msra.mxu0 %v286
    %948 = vmatprep.subr.mxu0 0.0
    %949 = vmatpush2.msra.mxu0 %v285
    %950 = vmatprep.mubr.f32.mxu0 %v379
    %951 = vmatmul.mubr.f32.gmra.mxu0 %v377
    %v952 = vpop.f32.mrf.mxu0
    %v953 = vadd.f32 %v883, %v952
    %v954 = vpop.f32.mrf.mxu0
    %955 = vdwg.mxu0
    %956 = vst [vmem:[#allocation7] sm:$0x3] %v953
    // Predicated region
    $region22: #{tpu_custom_call.1} parent=1 // pred_check
      _
    $region23: #{tpu_custom_call.1} parent=1 // pred_check_branch
      %958 = sbr.rel (0) target = $region25
    $region24: #{tpu_custom_call.1} parent=1 // pred_region
      %s960 = ssub.s32 32, 32
      %961 = vsyncadd [#allocation4], %s960
      %s963 = sshll.u32 [#allocation7], 4
      %s964 = int_to_ptr.vmem [resolvable:$true] %s963
      %966 = dma.vmem_to_hbm [thread:$0]  %s964, 32, %s3, [#allocation4]
    $region25: #{tpu_custom_call.1} parent=1 // pred_fallthru
      _
    // Predicated region
    $region26: #{tpu_custom_call.1} parent=1 // pred_check
      _
    $region27: #{tpu_custom_call.1} parent=1 // pred_check_branch
      %968 = sbr.rel (0) target = $region29
    $region28: #{tpu_custom_call.1} parent=1 // pred_region
      %969 = dma.done [#allocation4], 32
    $region29: #{tpu_custom_call.1} parent=1 // pred_fallthru
      _
    %970 = vsyncpa [#allocation3], 1
    %971 = vsyncpa [#allocation6], 1
    %972 = vsyncpa [#allocation4], 1

</llo_original>
